<compile_context>
chip_gen: v7x
topology: tpu7x:2x2x1
jax: 0.10.0
libtpu: 0.0.40
codegen_flags: <defaults>
</compile_context>

<pallas_src>
import jax
import jax.numpy as jnp
from jax.experimental import pallas as pl
from jax.experimental.pallas import tpu as pltpu


def linear_gelu_kernel(x_ref, w_ref, b_ref, o_ref):
    # v7 = linear(x)
    v7 = jnp.dot(x_ref[...], w_ref[...], preferred_element_type=jnp.float32)
    v7 = v7 + b_ref[...]
    # tanh-approx GELU, algebraically identical to the PyTorch module:
    #   v9  = v7 + 0.044715*v7^3 = v7 * (1 + 0.044715*v7^2)
    #   v13 = 0.5*v7 * (tanh(0.7978845608028654 * v9) + 1)
    inner = v7 * (1.0 + 0.044715 * v7 * v7) * 0.7978845608028654
    o_ref[...] = (0.5 * v7 * (1.0 + jnp.tanh(inner))).astype(o_ref.dtype)


def linear_gelu(x, w, b):
    N, K = x.shape
    K2, M = w.shape
    assert K == K2 and b.shape == (1, M)

    # Pad the lane (output-feature) axis up to a multiple of 128 so the kernel
    # writes a lane-dense slab (unmasked stores); zero-padded bias lanes are
    # harmless and get sliced away below.
    M_pad = max(128, ((M + 127) // 128) * 128)
    if M_pad != M:
        w = jnp.pad(w, ((0, 0), (0, M_pad - M)))
        b = jnp.pad(b, ((0, 0), (0, M_pad - M)))

    vmem_spec = pl.BlockSpec(memory_space=pltpu.MemorySpace.VMEM)
    out = pl.pallas_call(
        linear_gelu_kernel,
        out_shape=jax.ShapeDtypeStruct((N, M_pad), x.dtype),
        in_specs=[vmem_spec, vmem_spec, vmem_spec],
        out_specs=vmem_spec,
    )(x, w, b)
    return out[:, :M]


def reference(x, w, b):
    v7 = x @ w + b
    v8 = v7 * 0.5
    v9 = v7 + v7 * v7 * v7 * 0.044715
    v10 = v9 * 0.7978845608028654
    v11 = jnp.tanh(v10)
    v12 = v11 + 1.0
    return v8 * v12


if __name__ == "__main__":
    key = jax.random.PRNGKey(0)
    kx, kw, kb = jax.random.split(key, 3)

    in_features, out_features = 96, 12
    # Deterministic parameter init (matching nn.Linear's uniform bound shape-wise)
    bound = 1.0 / (in_features ** 0.5)
    w = jax.random.uniform(kw, (in_features, out_features), jnp.float32,
                           minval=-bound, maxval=bound)
    b = jax.random.uniform(kb, (1, out_features), jnp.float32,
                           minval=-bound, maxval=bound)

    x3 = jax.random.normal(kx, (1, in_features), jnp.float32)

    out = linear_gelu(x3, w, b)
    out = jax.block_until_ready(out)

    ref = reference(x3, w, b)
    assert out.shape == (1, out_features)
    assert jnp.allclose(out, ref, atol=1e-5, rtol=1e-5)
    print("KERNEL_OK")
</pallas_src>

<mosaic_0001>
module attributes {stable_mosaic.version = 11 : i64} {
  func.func @linear_gelu_kernel(%arg0: memref<1x96xf32, #tpu.memory_space<vmem>>, %arg1: memref<96x128xf32, #tpu.memory_space<vmem>>, %arg2: memref<1x128xf32, #tpu.memory_space<vmem>>, %arg3: memref<1x128xf32, #tpu.memory_space<vmem>>) attributes {dimension_semantics = [], scalar_prefetch = 0 : i64, scratch_operands = 0 : i64, tpu.core_type = #tpu.core_type<tc>} {
    %c0 = arith.constant 0 : index
    %c0_0 = arith.constant 0 : index
    %0 = vector.load %arg0[%c0, %c0_0] : memref<1x96xf32, #tpu.memory_space<vmem>>, vector<1x96xf32>
    %c0_1 = arith.constant 0 : index
    %c0_2 = arith.constant 0 : index
    %1 = vector.load %arg1[%c0_1, %c0_2] : memref<96x128xf32, #tpu.memory_space<vmem>>, vector<96x128xf32>
    %cst = arith.constant dense<0.000000e+00> : vector<1x128xf32>
    %2 = tpu.matmul %0, %1, %cst {dimension_numbers = #tpu.dot_dimension_numbers<[1], [0], [0], [1], [0, 0, 1, 1], [], []>} : vector<1x96xf32>, vector<96x128xf32>, vector<1x128xf32> -> vector<1x128xf32>
    %c0_3 = arith.constant 0 : index
    %c0_4 = arith.constant 0 : index
    %3 = vector.load %arg2[%c0_3, %c0_4] : memref<1x128xf32, #tpu.memory_space<vmem>>, vector<1x128xf32>
    %4 = arith.addf %2, %3 : vector<1x128xf32>
    %cst_5 = arith.constant 4.471500e-02 : f32
    %5 = vector.broadcast %cst_5 : f32 to vector<1x128xf32>
    %6 = arith.mulf %5, %4 : vector<1x128xf32>
    %7 = arith.mulf %6, %4 : vector<1x128xf32>
    %cst_6 = arith.constant 1.000000e+00 : f32
    %8 = vector.broadcast %cst_6 : f32 to vector<1x128xf32>
    %9 = arith.addf %8, %7 : vector<1x128xf32>
    %10 = arith.mulf %4, %9 : vector<1x128xf32>
    %cst_7 = arith.constant 0.797884583 : f32
    %11 = vector.broadcast %cst_7 : f32 to vector<1x128xf32>
    %12 = arith.mulf %10, %11 : vector<1x128xf32>
    %cst_8 = arith.constant 5.000000e-01 : f32
    %13 = vector.broadcast %cst_8 : f32 to vector<1x128xf32>
    %14 = arith.mulf %13, %4 : vector<1x128xf32>
    %15 = math.tanh %12 : vector<1x128xf32>
    %cst_9 = arith.constant 1.000000e+00 : f32
    %16 = vector.broadcast %cst_9 : f32 to vector<1x128xf32>
    %17 = arith.addf %16, %15 : vector<1x128xf32>
    %18 = arith.mulf %14, %17 : vector<1x128xf32>
    %c0_10 = arith.constant 0 : index
    %c0_11 = arith.constant 0 : index
    %19 = vector.load %arg3[%c0_10, %c0_11] : memref<1x128xf32, #tpu.memory_space<vmem>>, vector<1x128xf32>
    tpu.vector_store %arg3[%c0_10, %c0_11], %18 {strides = array<i32>} : memref<1x128xf32, #tpu.memory_space<vmem>>, vector<1x128xf32>,
    return
  }
}

</mosaic_0001>

<llo_original>
// kernel: tpu_custom_call.1
$region0: #{tpu_custom_call.1}
  #allocation0 [shape = 'u32[]', space=smem, size = 0x4, offset = 0x4, fixed_abs, tag = 'smem constant byte address 0x4 - core index']
  #allocation1 [shape = 'u32[144,128]{1,0:T(1,128)}', space=vmem, size = 0x12000, scoped, tag = 'internal scratch']
  %s0 = inlined_call_operand.hbm [shape: f32[1,96], index: 0, kind: input, shape index: {}]
  %s1 = inlined_call_operand.hbm [shape: f32[96,128], index: 1, kind: input, shape index: {}]
  %s2 = inlined_call_operand.vmem [shape: f32[1,128], index: 2, kind: input, shape index: {}]
  %s3 = inlined_call_operand.hbm [shape: f32[1,128], index: 3, kind: output, shape index: {}]
  %s4 = sld [smem:[#allocation0]]
  $region30: #{tpu_custom_call.1} parent=0
    _
  %s6 = ssub.s32 1, %s4
  %s7 = scalar_select 0, %s6, %s4
  $region1: #{tpu_custom_call.1} parent=0
    #allocation2 [shape = 'u8[512]{0}', space=vmem, size = 0x400, scoped, tag = 'input window, operand 0, single buffered']
    #allocation3 [shape = 's32[1]{0}', space=sflag, size = 0x4, scoped, tag = 'scoped memory for tpu_custom_call.1']
    #allocation4 [shape = 's32[1]{0}', space=sflag, size = 0x4, scoped, tag = 'scoped memory for tpu_custom_call.1']
    #allocation5 [shape = 'u8[49152]{0}', space=vmem, size = 0xc000, scoped, tag = 'input window, operand 1, single buffered']
    #allocation6 [shape = 's32[1]{0}', space=sflag, size = 0x4, scoped, tag = 'scoped memory for tpu_custom_call.1']
    #allocation7 [shape = 'u8[512]{0}', space=vmem, size = 0x400, scoped, tag = 'output window, operand 0, single buffered']
    %8 = vsyncpa [#allocation3], 0
    %9 = vsyncpa [#allocation6], 0
    %10 = vsyncpa [#allocation4], 0
    // Predicated region
    $region2: #{tpu_custom_call.1} parent=1 // pred_check
      _
    $region3: #{tpu_custom_call.1} parent=1 // pred_check_branch
      %12 = sbr.rel (0) target = $region5
    $region4: #{tpu_custom_call.1} parent=1 // pred_region
      %s14 = ssub.s32 16, 16
      %15 = vsyncadd [#allocation3], %s14
      %s17 = sshll.u32 [#allocation2], 4
      %s18 = int_to_ptr.vmem [resolvable:$true] %s17
      %20 = dma.hbm_to_vmem [thread:$0]  %s0, 16, %s18, [#allocation3]
    $region5: #{tpu_custom_call.1} parent=1 // pred_fallthru
      _
    // Predicated region
    $region6: #{tpu_custom_call.1} parent=1 // pred_check
      _
    $region7: #{tpu_custom_call.1} parent=1 // pred_check_branch
      %22 = sbr.rel (0) target = $region9
    $region8: #{tpu_custom_call.1} parent=1 // pred_region
      %s24 = ssub.s32 1536, 1536
      %25 = vsyncadd [#allocation6], %s24
      %s26 = sshll.u32 [#allocation5], 4
      %s27 = int_to_ptr.vmem [resolvable:$true] %s26
      %32 = dma.hbm_to_vmem [thread:$0]  %s1, 1536, %s27, [#allocation6], 128, 128, 8
    $region9: #{tpu_custom_call.1} parent=1 // pred_fallthru
      _
    // Predicated region
    $region10: #{tpu_custom_call.1} parent=1 // pred_check
      _
    $region11: #{tpu_custom_call.1} parent=1 // pred_check_branch
      %34 = sbr.rel (0) target = $region13
    $region12: #{tpu_custom_call.1} parent=1 // pred_region
      _
    $region13: #{tpu_custom_call.1} parent=1 // pred_fallthru
      _
    // Predicated region
    $region14: #{tpu_custom_call.1} parent=1 // pred_check
      _
    $region15: #{tpu_custom_call.1} parent=1 // pred_check_branch
      %36 = sbr.rel (0) target = $region17
    $region16: #{tpu_custom_call.1} parent=1 // pred_region
      %37 = dma.done [#allocation3], 16
    $region17: #{tpu_custom_call.1} parent=1 // pred_fallthru
      _
    // Predicated region
    $region18: #{tpu_custom_call.1} parent=1 // pred_check
      _
    $region19: #{tpu_custom_call.1} parent=1 // pred_check_branch
      %39 = sbr.rel (0) target = $region21
    $region20: #{tpu_custom_call.1} parent=1 // pred_region
      %40 = dma.done [#allocation6], 1536
    $region21: #{tpu_custom_call.1} parent=1 // pred_fallthru
      _
    %v41 = vld [vmem:[#allocation2] sm:$0x1]
    %v42 = vld [vmem:[#allocation5] sm:$0xff]
    %v43 = vld [vmem:[#allocation5 + $0x8] sm:$0xff]
    %v44 = vld [vmem:[#allocation5 + $0x10] sm:$0xff]
    %v45 = vld [vmem:[#allocation5 + $0x18] sm:$0xff]
    %v46 = vld [vmem:[#allocation5 + $0x20] sm:$0xff]
    %v47 = vld [vmem:[#allocation5 + $0x28] sm:$0xff]
    %v48 = vld [vmem:[#allocation5 + $0x30] sm:$0xff]
    %v49 = vld [vmem:[#allocation5 + $0x38] sm:$0xff]
    %v50 = vld [vmem:[#allocation5 + $0x40] sm:$0xff]
    %v51 = vld [vmem:[#allocation5 + $0x48] sm:$0xff]
    %v52 = vld [vmem:[#allocation5 + $0x50] sm:$0xff]
    %v53 = vld [vmem:[#allocation5 + $0x58] sm:$0xff]
    %v54 = vld [vmem:[%s2] sm:$0x1]
    %vm55 = vcmask 785408
    %v57 = vsel %vm55, %v41, 0
    %59 = vmatprep.subr.mxu0 0.0
    %60 = vmatpush1.msra.mxu0 %v42
    %61 = vmatprep.subr.mxu0 0.0
    %62 = vmatpush1.msra.mxu0 %v43
    %63 = vmatprep.subr.mxu0 0.0
    %64 = vmatpush1.msra.mxu0 %v44
    %65 = vmatprep.subr.mxu0 0.0
    %66 = vmatpush1.msra.mxu0 %v45
    %67 = vmatprep.subr.mxu0 0.0
    %68 = vmatpush1.msra.mxu0 %v46
    %69 = vmatprep.subr.mxu0 0.0
    %70 = vmatpush1.msra.mxu0 %v47
    %71 = vmatprep.subr.mxu0 0.0
    %72 = vmatpush1.msra.mxu0 %v48
    %73 = vmatprep.subr.mxu0 0.0
    %74 = vmatpush1.msra.mxu0 %v49
    %75 = vmatprep.subr.mxu0 0.0
    %76 = vmatpush1.msra.mxu0 %v50
    %77 = vmatprep.subr.mxu0 0.0
    %78 = vmatpush1.msra.mxu0 %v51
    %79 = vmatprep.subr.mxu0 0.0
    %80 = vmatpush1.msra.mxu0 %v52
    %81 = vmatprep.subr.mxu0 0.0
    %82 = vmatpush1.msra.mxu0 %v53
    %83 = vmatprep.subr.mxu0 0.0
    %84 = vmatpush1.msra.mxu0 0.0
    %85 = vmatprep.subr.mxu0 0.0
    %86 = vmatpush1.msra.mxu0 0.0
    %87 = vmatprep.subr.mxu0 0.0
    %88 = vmatpush1.msra.mxu0 0.0
    %89 = vmatprep.subr.mxu0 0.0
    %90 = vmatpush1.msra.mxu0 0.0
    %91 = vmatprep.subr.mxu0 0.0
    %92 = vmatpush1.msra.mxu0 0.0
    %93 = vmatprep.subr.mxu0 0.0
    %94 = vmatpush1.msra.mxu0 0.0
    %95 = vmatprep.subr.mxu0 0.0
    %96 = vmatpush1.msra.mxu0 0.0
    %97 = vmatprep.subr.mxu0 0.0
    %98 = vmatpush1.msra.mxu0 0.0
    %99 = vmatprep.subr.mxu0 0.0
    %100 = vmatpush1.msra.mxu0 0.0
    %101 = vmatprep.subr.mxu0 0.0
    %102 = vmatpush1.msra.mxu0 0.0
    %103 = vmatprep.subr.mxu0 0.0
    %104 = vmatpush1.msra.mxu0 0.0
    %105 = vmatprep.subr.mxu0 0.0
    %106 = vmatpush1.msra.mxu0 0.0
    %107 = vmatprep.subr.mxu0 0.0
    %108 = vmatpush1.msra.mxu0 0.0
    %109 = vmatprep.subr.mxu0 0.0
    %110 = vmatpush1.msra.mxu0 0.0
    %111 = vmatprep.subr.mxu0 0.0
    %112 = vmatpush1.msra.mxu0 0.0
    %113 = vmatprep.subr.mxu0 0.0
    %114 = vmatpush1.msra.mxu0 0.0
    %115 = vmatprep.subr.mxu0 0.0
    %116 = vmatpush1.msra.mxu0 0.0
    %117 = vmatprep.subr.mxu0 0.0
    %118 = vmatpush1.msra.mxu0 0.0
    %119 = vmatprep.subr.mxu0 0.0
    %120 = vmatpush1.msra.mxu0 0.0
    %121 = vmatprep.subr.mxu0 0.0
    %122 = vmatpush1.msra.mxu0 0.0
    %123 = vmatprep.mubr.f32.mxu0 0.0
    %124 = vmatmul.mubr.f32.gmra.mrb[0].mxu0 %v57
    %v125 = vpop.f32.mrb[0].mxu0
    %v126 = vadd.f32 %v54, %v125
    %v127 = vpop.f32.mrb[0].mxu0
    %128 = vdwg.mxu0
    %v129 = vmul.f32 %v126, 0.044715
    %v130 = vmul.f32 %v129, %v126
    %v131 = vadd.f32 %v130, 1.0
    %v132 = vmul.f32 %v126, %v131
    %v133 = vmul.f32 %v132, 0.7978846
    %v134 = vmul.f32 %v126, 0.5
    %v135 = vtanh.pop %v133
    %v136 = vadd.f32 %v135, 1.0
    %v137 = vmul.f32 %v134, %v136
    %138 = vst [vmem:[#allocation7] sm:$0x1] %v137
    // Predicated region
    $region22: #{tpu_custom_call.1} parent=1 // pred_check
      _
    $region23: #{tpu_custom_call.1} parent=1 // pred_check_branch
      %140 = sbr.rel (0) target = $region25
    $region24: #{tpu_custom_call.1} parent=1 // pred_region
      %s142 = ssub.s32 16, 16
      %143 = vsyncadd [#allocation4], %s142
      %s145 = sshll.u32 [#allocation7], 4
      %s146 = int_to_ptr.vmem [resolvable:$true] %s145
      %148 = dma.vmem_to_hbm [thread:$0]  %s146, 16, %s3, [#allocation4]
    $region25: #{tpu_custom_call.1} parent=1 // pred_fallthru
      _
    // Predicated region
    $region26: #{tpu_custom_call.1} parent=1 // pred_check
      _
    $region27: #{tpu_custom_call.1} parent=1 // pred_check_branch
      %150 = sbr.rel (0) target = $region29
    $region28: #{tpu_custom_call.1} parent=1 // pred_region
      %151 = dma.done [#allocation4], 16
    $region29: #{tpu_custom_call.1} parent=1 // pred_fallthru
      _
    %152 = vsyncpa [#allocation3], 1
    %153 = vsyncpa [#allocation6], 1
    %154 = vsyncpa [#allocation4], 1

</llo_original>
